<compile_context>
chip_gen: v7x
topology: tpu7x:2x2x1
jax: 0.10.0
libtpu: 0.0.40
codegen_flags: <defaults>
</compile_context>

<pallas_src>
import jax
import jax.numpy as jnp
import numpy as np
from jax.experimental import pallas as pl
from jax.experimental.pallas import tpu as pltpu


# ----------------------------- tiling / VMEM helpers ------------------------

_MXU_TILE_PREFS = (512, 256, 128)                    # lane / contraction tiles
_SUBLANE_TILE_PREFS = (512, 256, 128, 64, 32, 16, 8)  # M (row) tiles

_VMEM_LIMIT = None


def _vmem_limit_bytes():
    """Generation-aware scoped-VMEM budget: ~3/4 of physical, capped at 96 MiB.

    v5e / v6e (128 MiB physical) -> 96 MiB ; v7x (64 MiB per TC) -> 48 MiB.
    """
    global _VMEM_LIMIT
    if _VMEM_LIMIT is None:
        try:
            cap = int(pltpu.get_tpu_info().vmem_capacity_bytes)
        except Exception:
            cap = 64 * 1024 * 1024  # conservative (v7x-safe) fallback
        _VMEM_LIMIT = min((cap * 3) // 4, 96 * 1024 * 1024)
    return _VMEM_LIMIT


def _pick_tile(dim, prefs):
    """Largest preferred tile that divides `dim`, else the full extent (always legal)."""
    for p in prefs:
        if p <= dim and dim % p == 0:
            return p
    return dim


def _round_up(x, m):
    return ((x + m - 1) // m) * m


# ----------------------------- forward kernels -------------------------------


def _linear_single_k_kernel(x_ref, w_ref, b_ref, o_ref):
    """Single-K-tile linear: no scratch, no pl.when -- dot + bias straight to the output.

    x_ref: (tm, tk)  w_ref: (tk, tn)  b_ref: (1, tn)  o_ref: (tm, tn)
    """
    acc = jnp.dot(x_ref[...], w_ref[...], preferred_element_type=jnp.float32)
    o_ref[...] = (acc + b_ref[...].astype(jnp.float32)).astype(o_ref.dtype)


def _make_linear_multi_k_kernel(k_axis):
    """Multi-K linear with f32 VMEM accumulator; bias folded into the k==0 init."""

    def kernel(x_ref, w_ref, b_ref, o_ref, acc_ref):
        k = pl.program_id(k_axis)

        @pl.when(k == 0)
        def _():
            # Bias folded into the accumulator init: saves the zero fill and a
            # full-tile VPU add at finalize.
            acc_ref[...] = jnp.broadcast_to(
                b_ref[...].astype(jnp.float32), acc_ref.shape)

        acc_ref[...] += jnp.dot(x_ref[...], w_ref[...],
                                preferred_element_type=jnp.float32)

        @pl.when(k == pl.num_programs(k_axis) - 1)
        def _():
            o_ref[...] = acc_ref[...].astype(o_ref.dtype)

    return kernel


def _replica_forward(x_sharded, w_stacked, b_stacked):
    """Per-replica forward over an (S, M, N, K) grid (distinct weights per replica)."""
    S, Bs, Din = x_sharded.shape
    Dout = w_stacked.shape[2]

    tm = _pick_tile(Bs, _SUBLANE_TILE_PREFS)
    tn = _pick_tile(Dout, _MXU_TILE_PREFS)
    tk = _pick_tile(Din, _MXU_TILE_PREFS)
    kt = Din // tk
    grid = (S, Bs // tm, Dout // tn, kt)
    single_k = kt == 1

    kernel = _linear_single_k_kernel if single_k else _make_linear_multi_k_kernel(3)
    scratch = () if single_k else (pltpu.VMEM((tm, tn), jnp.float32),)

    return pl.pallas_call(
        kernel,
        out_shape=jax.ShapeDtypeStruct((S, Bs, Dout), x_sharded.dtype),
        grid_spec=pltpu.PrefetchScalarGridSpec(
            num_scalar_prefetch=0,
            grid=grid,
            in_specs=[
                pl.BlockSpec((None, tm, tk), lambda s, m, n, k: (s, m, k)),
                pl.BlockSpec((None, tk, tn), lambda s, m, n, k: (s, k, n)),
                pl.BlockSpec((None, 1, tn), lambda s, m, n, k: (s, 0, n)),
            ],
            out_specs=pl.BlockSpec((None, tm, tn), lambda s, m, n, k: (s, m, n)),
            scratch_shapes=scratch,
        ),
        compiler_params=pltpu.CompilerParams(
            dimension_semantics=("parallel", "parallel", "parallel", "arbitrary"),
            vmem_limit_bytes=_vmem_limit_bytes(),
        ),
    )(x_sharded, w_stacked, b_stacked)


def _shared_forward(x, w_shared, b_shared):
    """Shared-weight forward (post-reset / eval): replica axis collapsed into M.

    The scatter -> per-replica matmul -> gather(dim 0) sequence with identical weights
    equals one full-batch matmul, so M = full batch: taller MXU tiles, W streamed once,
    ~S x fewer grid steps.  With tm <= 512, any real M >= 1024 yields >= 2 parallel
    M tiles for v7x megacore sharding.
    """
    M, Din = x.shape
    Dout = w_shared.shape[2]

    tm = _pick_tile(M, _SUBLANE_TILE_PREFS)
    tn = _pick_tile(Dout, _MXU_TILE_PREFS)
    tk = _pick_tile(Din, _MXU_TILE_PREFS)
    kt = Din // tk
    grid = (M // tm, Dout // tn, kt)
    single_k = kt == 1

    kernel = _linear_single_k_kernel if single_k else _make_linear_multi_k_kernel(2)
    scratch = () if single_k else (pltpu.VMEM((tm, tn), jnp.float32),)

    return pl.pallas_call(
        kernel,
        out_shape=jax.ShapeDtypeStruct((M, Dout), x.dtype),
        grid_spec=pltpu.PrefetchScalarGridSpec(
            num_scalar_prefetch=0,
            grid=grid,
            in_specs=[
                pl.BlockSpec((tm, tk), lambda m, n, k: (m, k)),
                pl.BlockSpec((None, tk, tn), lambda m, n, k: (0, k, n)),
                pl.BlockSpec((None, 1, tn), lambda m, n, k: (0, 0, n)),
            ],
            out_specs=pl.BlockSpec((tm, tn), lambda m, n, k: (m, n)),
            scratch_shapes=scratch,
        ),
        compiler_params=pltpu.CompilerParams(
            dimension_semantics=("parallel", "parallel", "arbitrary"),
            vmem_limit_bytes=_vmem_limit_bytes(),
        ),
    )(x, w_shared, b_shared)


# ----------------------------- reset (averaging) kernels ---------------------


def _make_weight_avg_kernel(inv_s):
    """Average the weight stack over the replica axis.

    Grid = (I, J, S) with S innermost "arbitrary"; VMEM footprint is constant in S.
      w_ref: (tm, tn)  wavg_ref: (tm, tn)  acc_ref: VMEM (tm, tn) f32.
    """

    def kernel(w_ref, wavg_ref, acc_ref):
        s = pl.program_id(2)

        @pl.when(s == 0)
        def _():
            acc_ref[...] = jnp.zeros_like(acc_ref)

        acc_ref[...] += w_ref[...].astype(jnp.float32)

        @pl.when(s == pl.num_programs(2) - 1)
        def _():
            wavg_ref[...] = (acc_ref[...] * inv_s).astype(wavg_ref.dtype)

    return kernel


def _make_bias_avg_kernel(inv_s):
    """Average the (tiny) bias stack over the replica axis; lane-tiled over D_out."""

    def kernel(b_ref, bavg_ref):
        bavg_ref[...] = (jnp.sum(b_ref[...].astype(jnp.float32), axis=0) * inv_s
                         ).astype(bavg_ref.dtype)

    return kernel


def _average_replicas(w_stacked, b_stacked):
    """local-SGD `reset`: cross-replica parameter average.

    Writes ONE averaged copy ([1, ...]) instead of S identical copies; the forward's
    shared-weight path consumes it directly (no S-fold HBM writeback / re-read).
    """
    S, Din, Dout = w_stacked.shape
    inv_s = 1.0 / S

    tm = _pick_tile(Din, _MXU_TILE_PREFS)
    tn = _pick_tile(Dout, _MXU_TILE_PREFS)

    w_avg = pl.pallas_call(
        _make_weight_avg_kernel(inv_s),
        out_shape=jax.ShapeDtypeStruct((1, Din, Dout), w_stacked.dtype),
        grid_spec=pltpu.PrefetchScalarGridSpec(
            num_scalar_prefetch=0,
            grid=(Din // tm, Dout // tn, S),
            in_specs=[pl.BlockSpec((None, tm, tn), lambda i, j, s: (s, i, j))],
            out_specs=pl.BlockSpec((None, tm, tn), lambda i, j, s: (0, i, j)),
            scratch_shapes=(pltpu.VMEM((tm, tn), jnp.float32),),
        ),
        compiler_params=pltpu.CompilerParams(
            # (i, j) weight tiles have no cross-tile dependence: both v7x TensorCores
            # split this memory-bound grid; the S axis is the accumulation axis.
            dimension_semantics=("parallel", "parallel", "arbitrary"),
            vmem_limit_bytes=_vmem_limit_bytes(),
        ),
    )(w_stacked)

    b_avg = pl.pallas_call(
        _make_bias_avg_kernel(inv_s),
        out_shape=jax.ShapeDtypeStruct((1, 1, Dout), b_stacked.dtype),
        grid_spec=pltpu.PrefetchScalarGridSpec(
            num_scalar_prefetch=0,
            grid=(Dout // tn,),
            in_specs=[pl.BlockSpec((S, 1, tn), lambda j: (0, 0, j))],
            out_specs=pl.BlockSpec((None, 1, tn), lambda j: (0, 0, j)),
        ),
        compiler_params=pltpu.CompilerParams(
            dimension_semantics=("parallel",),
            vmem_limit_bytes=_vmem_limit_bytes(),
        ),
    )(b_stacked)

    return w_avg, b_avg


# ----------------------------------- module ----------------------------------


class LocalSGD:
    """JAX/Pallas port of splintr LocalSGD wrapping a Linear(d_in -> d_out) model."""

    def __init__(self, d_in, d_out, split=2, iterations=40, seed=0):
        self.split = split
        self.iterations = iterations
        self.iteration_count = 0
        self.training = True
        self.d_in = d_in
        self.d_out = d_out
        # Pad parameter dims to multiples of 128: lane-dense (unmasked) output stores
        # and MXU-aligned K tiles regardless of user shapes.  Zero padding is exact.
        self.d_in_p = _round_up(d_in, 128)
        self.d_out_p = _round_up(d_out, 128)

        key = jax.random.PRNGKey(seed)
        kw, kb = jax.random.split(key)
        w = 0.02 * jax.random.normal(kw, (d_out, d_in), jnp.float32)
        b = 0.02 * jax.random.normal(kb, (1, d_out), jnp.float32)
        w_t = jnp.zeros((self.d_in_p, self.d_out_p), jnp.float32)
        w_t = w_t.at[:d_in, :d_out].set(w.T)               # pre-transposed: x @ W
        b_p = jnp.zeros((1, self.d_out_p), jnp.float32).at[:, :d_out].set(b)
        # copy.deepcopy per simulated device -> identical initial replicas.
        self.w = jnp.tile(w_t[None], (split, 1, 1))        # [S, D_in_p, D_out_p]
        self.b = jnp.tile(b_p[None], (split, 1, 1))        # [S, 1, D_out_p]

    def reset(self):
        # After averaging, every replica holds identical parameters; keep one shared
        # copy ([1, ...]) and let the forward collapse the replica axis into M.
        # TODO(synk): if per-replica optimizer steps are added, re-expand to [S, ...].
        self.w, self.b = _average_replicas(self.w, self.b)

    def __call__(self, x):
        B, Din = x.shape
        assert Din == self.d_in, f"expected input dim {self.d_in}, got {Din}"
        if Din != self.d_in_p:
            x = jnp.pad(x, ((0, 0), (0, self.d_in_p - Din)))

        if self.training:
            if self.iteration_count == self.iterations:
                self.reset()
                self.iteration_count = 0
            assert B % self.split == 0, (
                f"batch {B} must be divisible by split {self.split}")
            self.iteration_count += 1
            if self.w.shape[0] == 1:
                # Shared weights (post-reset): scatter/compute/gather == one full-batch
                # matmul -> collapsed (M, N, K) grid.
                out = _shared_forward(x, self.w, self.b)            # [B, D_out_p]
            else:
                Bs = B // self.split
                # torch.cuda.comm.scatter along dim 0 -> contiguous shards
                x_sharded = x.reshape(self.split, Bs, self.d_in_p)
                out = _replica_forward(x_sharded, self.w, self.b)   # [S, Bs, D_out_p]
                # torch.cuda.comm.gather(destination=-1) concatenates along dim 0
                out = out.reshape(B, self.d_out_p)
        else:
            # eval: run replica 0 on the whole batch (same collapsed path)
            out = _shared_forward(x, self.w[0:1], self.b[0:1])       # [B, D_out_p]

        return out[:, :self.d_out] if self.d_out != self.d_out_p else out


# ------------------------------------ main ------------------------------------


if __name__ == "__main__":
    # (8,128)-aligned demo sizes: Bs = B/split = 8 rows per replica shard,
    # D_in = D_out = 128 (single K tile -> exercises the scratch-free kernel).
    B, D_IN, D_OUT, SPLIT = 16, 128, 128, 2

    module = LocalSGD(D_IN, D_OUT, split=SPLIT, iterations=40, seed=0)

    key = jax.random.PRNGKey(0)
    x = jax.random.normal(key, (B, D_IN), jnp.float32)

    # reference (float64 numpy): replicas are identical deepcopies, so the gathered
    # output equals a full-batch linear with replica-0 parameters.
    x64 = np.asarray(x, np.float64)
    w0 = np.asarray(module.w[0, :D_IN, :D_OUT], np.float64)   # [D_in, D_out]
    b0 = np.asarray(module.b[0, :, :D_OUT], np.float64)       # [1, D_out]
    y_ref = x64 @ w0 + b0

    # training forward: per-replica path (distinct weight copies, (S,M,N,K) grid)
    y = jax.block_until_ready(module(x))
    assert y.shape == (B, D_OUT)
    assert np.allclose(np.asarray(y, np.float64), y_ref, rtol=1e-2, atol=1e-2), \
        "training forward mismatch vs reference"

    # local-SGD reset: cross-replica average; identical replicas -> identity.
    module.reset()
    jax.block_until_ready(module.w)
    assert module.w.shape == (1, module.d_in_p, module.d_out_p)
    assert module.b.shape == (1, 1, module.d_out_p)
    assert np.allclose(np.asarray(module.w[0, :D_IN, :D_OUT], np.float64), w0,
                       rtol=1e-6, atol=1e-6), "reset averaging mismatch"

    # training forward again: exercises the collapsed shared-weight (M,N,K) path
    y2 = jax.block_until_ready(module(x))
    assert y2.shape == (B, D_OUT)
    assert np.allclose(np.asarray(y2, np.float64), y_ref, rtol=1e-2, atol=1e-2), \
        "post-reset forward mismatch vs reference"

    # eval path: replica 0 on the whole batch
    module.training = False
    y_eval = jax.block_until_ready(module(x))
    assert y_eval.shape == (B, D_OUT)
    assert np.allclose(np.asarray(y_eval, np.float64), y_ref, rtol=1e-2, atol=1e-2), \
        "eval forward mismatch vs reference"

    print("KERNEL_OK")
</pallas_src>

<mosaic_0001>
module attributes {stable_mosaic.version = 11 : i64} {
  func.func @_linear_single_k_kernel(%arg0: i32, %arg1: i32, %arg2: i32, %arg3: i32, %arg4: memref<1x8x128xf32, #tpu.memory_space<vmem>>, %arg5: memref<1x128x128xf32, #tpu.memory_space<vmem>>, %arg6: memref<1x1x128xf32, #tpu.memory_space<vmem>>, %arg7: memref<1x8x128xf32, #tpu.memory_space<vmem>>) attributes {dimension_semantics = [#tpu.dimension_semantics<parallel>, #tpu.dimension_semantics<parallel>, #tpu.dimension_semantics<parallel>, #tpu.dimension_semantics<arbitrary>], iteration_bounds = array<i64: 2, 1, 1, 1>, scalar_prefetch = 0 : i64, scratch_operands = 0 : i64, tpu.core_type = #tpu.core_type<tc>, window_params = [{transform_indices = @transform_0, window_bounds = array<i64: 1, 8, 128>}, {transform_indices = @transform_1, window_bounds = array<i64: 1, 128, 128>}, {transform_indices = @transform_2, window_bounds = array<i64: 1, 1, 128>}, {transform_indices = @transform_3, window_bounds = array<i64: 1, 8, 128>}]} {
    %c0 = arith.constant 0 : index
    %c0_0 = arith.constant 0 : index
    %c0_1 = arith.constant 0 : index
    %0 = vector.load %arg4[%c0, %c0_0, %c0_1] : memref<1x8x128xf32, #tpu.memory_space<vmem>>, vector<1x8x128xf32>
    %1 = vector.shape_cast %0 : vector<1x8x128xf32> to vector<8x128xf32>
    %c0_2 = arith.constant 0 : index
    %c0_3 = arith.constant 0 : index
    %c0_4 = arith.constant 0 : index
    %2 = vector.load %arg5[%c0_2, %c0_3, %c0_4] : memref<1x128x128xf32, #tpu.memory_space<vmem>>, vector<1x128x128xf32>
    %3 = vector.shape_cast %2 : vector<1x128x128xf32> to vector<128x128xf32>
    %cst = arith.constant dense<0.000000e+00> : vector<8x128xf32>
    %4 = tpu.matmul %1, %3, %cst {dimension_numbers = #tpu.dot_dimension_numbers<[1], [0], [0], [1], [0, 0, 1, 1], [], []>} : vector<8x128xf32>, vector<128x128xf32>, vector<8x128xf32> -> vector<8x128xf32>
    %c0_5 = arith.constant 0 : index
    %c0_6 = arith.constant 0 : index
    %c0_7 = arith.constant 0 : index
    %5 = vector.load %arg6[%c0_5, %c0_6, %c0_7] : memref<1x1x128xf32, #tpu.memory_space<vmem>>, vector<1x1x128xf32>
    %6 = vector.shape_cast %5 : vector<1x1x128xf32> to vector<1x128xf32>
    %7 = vector.broadcast %6 : vector<1x128xf32> to vector<8x128xf32>
    %8 = arith.addf %4, %7 : vector<8x128xf32>
    %c0_8 = arith.constant 0 : index
    %c0_9 = arith.constant 0 : index
    %c0_10 = arith.constant 0 : index
    %9 = vector.load %arg7[%c0_8, %c0_9, %c0_10] : memref<1x8x128xf32, #tpu.memory_space<vmem>>, vector<1x8x128xf32>
    %10 = vector.shape_cast %9 : vector<1x8x128xf32> to vector<8x128xf32>
    %11 = vector.shape_cast %8 : vector<8x128xf32> to vector<1x8x128xf32>
    tpu.vector_store %arg7[%c0_8, %c0_9, %c0_10], %11 {strides = array<i32>} : memref<1x8x128xf32, #tpu.memory_space<vmem>>, vector<1x8x128xf32>,
    return
  }
  func.func @transform_0(%arg0: i32, %arg1: i32, %arg2: i32, %arg3: i32) -> (i32, i32, i32) {
    %c0_i32 = arith.constant 0 : i32
    return %arg0, %arg1, %arg3 : i32, i32, i32
  }
  func.func @transform_1(%arg0: i32, %arg1: i32, %arg2: i32, %arg3: i32) -> (i32, i32, i32) {
    %c0_i32 = arith.constant 0 : i32
    return %arg0, %arg3, %arg2 : i32, i32, i32
  }
  func.func @transform_2(%arg0: i32, %arg1: i32, %arg2: i32, %arg3: i32) -> (i32, i32, i32) {
    %c0_i32 = arith.constant 0 : i32
    %c0_i32_0 = arith.constant 0 : i32
    return %arg0, %c0_i32, %arg2 : i32, i32, i32
  }
  func.func @transform_3(%arg0: i32, %arg1: i32, %arg2: i32, %arg3: i32) -> (i32, i32, i32) {
    %c0_i32 = arith.constant 0 : i32
    return %arg0, %arg1, %arg2 : i32, i32, i32
  }
}

</mosaic_0001>

<llo_original>
// kernel: tpu_custom_call.1
$region0: #{tpu_custom_call.1}
  #allocation0 [shape = 'u32[]', space=smem, size = 0x4, offset = 0x4, fixed_abs, tag = 'smem constant byte address 0x4 - core index']
  #allocation1 [shape = 'u32[144,128]{1,0:T(1,128)}', space=vmem, size = 0x12000, scoped, tag = 'internal scratch']
  %s0 = inlined_call_operand.hbm [shape: f32[2,8,128], index: 0, kind: input, shape index: {}]
  %s1 = inlined_call_operand.hbm [shape: f32[2,128,128], index: 1, kind: input, shape index: {}]
  %s2 = inlined_call_operand.vmem [shape: f32[2,1,128], index: 2, kind: input, shape index: {}]
  %s3 = inlined_call_operand.hbm [shape: f32[2,8,128], index: 3, kind: output, shape index: {}]
  %s4 = sld [smem:[#allocation0]]
  $region53: #{tpu_custom_call.1} parent=0
    _
  %s6 = ssub.s32 1, %s4
  %s7 = scalar_select 0, %s6, %s4
  $region1: #{tpu_custom_call.1} parent=0
    #allocation2 [shape = 'u8[8192]{0}', space=vmem, size = 0x2000, scoped, tag = 'input window, operand 0']
    #allocation3 [shape = 's32[2]{0}', space=sflag, size = 0x8, scoped, tag = 'scoped memory for tpu_custom_call.1']
    #allocation4 [shape = 's32[2]{0}', space=sflag, size = 0x8, scoped, tag = 'scoped memory for tpu_custom_call.1']
    #allocation5 [shape = 'u8[131072]{0}', space=vmem, size = 0x20000, scoped, tag = 'input window, operand 1']
    #allocation6 [shape = 's32[2]{0}', space=sflag, size = 0x8, scoped, tag = 'scoped memory for tpu_custom_call.1']
    #allocation7 [shape = 'u8[8192]{0}', space=vmem, size = 0x2000, scoped, tag = 'output window, operand 0']
    %8 = vsyncpa [#allocation3], 0
    %s9 = scalar_lea.sflag [#allocation3], 1
    %10 = vsyncpa %s9, 0
    %11 = vsyncpa [#allocation6], 0
    %s12 = scalar_lea.sflag [#allocation6], 1
    %13 = vsyncpa %s12, 0
    %14 = vsyncpa [#allocation4], 0
    %s15 = scalar_lea.sflag [#allocation4], 1
    %16 = vsyncpa %s15, 0
    loop: start=0, step=1, limit=4
    $region2: #{tpu_custom_call.1} parent=1 // loop_pre_header
      _
    $region3: #{tpu_custom_call.1} parent=1 // loop_header
      %s18 = sphi 0, %s22
      %p19 = scmp.ge.s32.totalorder %s18, 4
      %s25 = sphi 0, %s51
      %s26 = sphi 0, %s47
      %s27 = sphi 0, %s43
      %s28 = sphi 0, %s39
      %s29 = sphi 0, %s25
      %s30 = sphi 0, %s26
      %s31 = sphi 0, %s27
      %s32 = sphi 0, %s28
      %s33 = sphi 0, %s29
      %s34 = sphi 0, %s30
      %s35 = sphi 0, %s31
      %s36 = sphi 0, %s32
      %s58 = sphi 0, %s60
      %s61 = sphi 0, %s58
      %s62 = sphi 0, %s61
      %s78 = sphi 0, %s62
      %s88 = sphi 0, %s90
      %s91 = sphi 0, %s88
      %s92 = sphi 0, %s91
      %s108 = sphi 0, %s92
      %s116 = sphi 0, %s118
      %s119 = sphi 0, %s116
      %s120 = sphi 0, %s119
      %s136 = sphi 0, %s120
      %s146 = sphi 0, %s148
      %s149 = sphi 0, %s146
      %s150 = sphi 0, %s149
      %s166 = sphi 0, %s150
    $region4: #{tpu_custom_call.1} parent=1 // loop_header_branch
      %21 = sbr.rel (%p19) target = $region8
    $region5: #{tpu_custom_call.1} parent=1 // loop_body
      %s23 = ssub.s32 %s18, 1
      %s24 = ssub.s32 %s18, 2
      %s37 = sadd.s32 1, %s28
      %p38 = scmp.ge.s32.totalorder %s37, 1
      %s39 = scalar_select %p38, 0, %s37
      %s40 = sadd.s32 1, %s27
      %s41 = scalar_select %p38, %s40, %s27
      %p42 = scmp.ge.s32.totalorder %s41, 1
      %s43 = scalar_select %p42, 0, %s41
      %s44 = sadd.s32 1, %s26
      %s45 = scalar_select %p42, %s44, %s26
      %p46 = scmp.ge.s32.totalorder %s45, 1
      %s47 = scalar_select %p46, 0, %s45
      %s48 = sadd.s32 1, %s25
      %s49 = scalar_select %p46, %s48, %s25
      %p50 = scmp.ge.s32.totalorder %s49, 2
      %s51 = scalar_select %p50, 0, %s49
      %s52 = ssub.s32 %s25, %s51
      %s53 = ssub.s32 %s26, %s47
      %s54 = sor.u32 %s52, %s53
      %s55 = ssub.s32 %s28, %s39
      %s56 = sor.u32 %s54, %s55
      %p57 = scmp.eq.s32.totalorder %s56, 0
      %s59 = sadd.s32 %s58, 1
      %s60 = scalar_select %p57, %s58, %s59
      %p63 = pneg %p57
      %p64 = scmp.eq.s32.totalorder %s18, 1
      %p65 = por %p63, %p64
      %p66 = scmp.ne.s32.totalorder %s58, %s61
      %p67 = scmp.eq.s32.totalorder %s18, 0
      %p68 = por %p66, %p67
      %p69 = scmp.ne.s32.totalorder %s58, %s61
      %p70 = scmp.eq.s32.totalorder %s23, 1
      %p71 = por %p69, %p70
      %p72 = scmp.ne.s32.totalorder %s61, %s62
      %p73 = scmp.eq.s32.totalorder %s23, 0
      %p74 = por %p72, %p73
      %p75 = scmp.ne.s32.totalorder %s61, %s62
      %p76 = scmp.eq.s32.totalorder %s24, 1
      %p77 = por %p75, %p76
      %p79 = scmp.ne.s32.totalorder %s62, %s78
      %p80 = scmp.eq.s32.totalorder %s24, 0
      %p81 = por %p79, %p80
      %s82 = ssub.s32 %s25, %s51
      %s83 = ssub.s32 %s28, %s39
      %s84 = sor.u32 %s82, %s83
      %s85 = ssub.s32 %s27, %s43
      %s86 = sor.u32 %s84, %s85
      %p87 = scmp.eq.s32.totalorder %s86, 0
      %s89 = sadd.s32 %s88, 1
      %s90 = scalar_select %p87, %s88, %s89
      %p93 = pneg %p87
      %p94 = scmp.eq.s32.totalorder %s18, 1
      %p95 = por %p93, %p94
      %p96 = scmp.ne.s32.totalorder %s88, %s91
      %p97 = scmp.eq.s32.totalorder %s18, 0
      %p98 = por %p96, %p97
      %p99 = scmp.ne.s32.totalorder %s88, %s91
      %p100 = scmp.eq.s32.totalorder %s23, 1
      %p101 = por %p99, %p100
      %p102 = scmp.ne.s32.totalorder %s91, %s92
      %p103 = scmp.eq.s32.totalorder %s23, 0
      %p104 = por %p102, %p103
      %p105 = scmp.ne.s32.totalorder %s91, %s92
      %p106 = scmp.eq.s32.totalorder %s24, 1
      %p107 = por %p105, %p106
      %p109 = scmp.ne.s32.totalorder %s92, %s108
      %p110 = scmp.eq.s32.totalorder %s24, 0
      %p111 = por %p109, %p110
      %s112 = ssub.s32 %s25, %s51
      %s113 = ssub.s32 %s27, %s43
      %s114 = sor.u32 %s112, %s113
      %p115 = scmp.eq.s32.totalorder %s114, 0
      %s117 = sadd.s32 %s116, 1
      %s118 = scalar_select %p115, %s116, %s117
      %p121 = pneg %p115
      %p122 = scmp.eq.s32.totalorder %s18, 1
      %p123 = por %p121, %p122
      %p124 = scmp.ne.s32.totalorder %s116, %s119
      %p125 = scmp.eq.s32.totalorder %s18, 0
      %p126 = por %p124, %p125
      %p127 = scmp.ne.s32.totalorder %s116, %s119
      %p128 = scmp.eq.s32.totalorder %s23, 1
      %p129 = por %p127, %p128
      %p130 = scmp.ne.s32.totalorder %s119, %s120
      %p131 = scmp.eq.s32.totalorder %s23, 0
      %p132 = por %p130, %p131
      %p133 = scmp.ne.s32.totalorder %s119, %s120
      %p134 = scmp.eq.s32.totalorder %s24, 1
      %p135 = por %p133, %p134
      %p137 = scmp.ne.s32.totalorder %s120, %s136
      %p138 = scmp.eq.s32.totalorder %s24, 0
      %p139 = por %p137, %p138
      %s140 = ssub.s32 %s25, %s51
      %s141 = ssub.s32 %s26, %s47
      %s142 = sor.u32 %s140, %s141
      %s143 = ssub.s32 %s27, %s43
      %s144 = sor.u32 %s142, %s143
      %p145 = scmp.eq.s32.totalorder %s144, 0
      %s147 = sadd.s32 %s146, 1
      %s148 = scalar_select %p145, %s146, %s147
      %p151 = pneg %p145
      %p152 = scmp.eq.s32.totalorder %s18, 1
      %p153 = por %p151, %p152
      %p154 = scmp.ne.s32.totalorder %s146, %s149
      %p155 = scmp.eq.s32.totalorder %s18, 0
      %p156 = por %p154, %p155
      %p157 = scmp.ne.s32.totalorder %s146, %s149
      %p158 = scmp.eq.s32.totalorder %s23, 1
      %p159 = por %p157, %p158
      %p160 = scmp.ne.s32.totalorder %s149, %s150
      %p161 = scmp.eq.s32.totalorder %s23, 0
      %p162 = por %p160, %p161
      %p163 = scmp.ne.s32.totalorder %s149, %s150
      %p164 = scmp.eq.s32.totalorder %s24, 1
      %p165 = por %p163, %p164
      %p167 = scmp.ne.s32.totalorder %s150, %s166
      %p168 = scmp.eq.s32.totalorder %s24, 0
      %p169 = por %p167, %p168
      %p170 = scmp.le.s32.totalorder 1, %s18
      %p171 = scmp.lt.s32.totalorder %s18, 3
      %p172 = pnand %p170, %p171
      %p173 = pneg %p172
      // Predicated region
      $region9: #{tpu_custom_call.1} parent=5 // pred_check
        _
      $region10: #{tpu_custom_call.1} parent=5 // pred_check_branch
        %175 = sbr.rel (%p172) target = $region12
      $region11: #{tpu_custom_call.1} parent=5 // pred_region
        %s176 = ssub.s32 %s18, 1
      $region12: #{tpu_custom_call.1} parent=5 // pred_fallthru
        _
      %p177 = scmp.lt.s32.totalorder %s18, 2
      // Predicated region
      $region13: #{tpu_custom_call.1} parent=5 // pred_check
        %p178 = pneg %p177
      $region14: #{tpu_custom_call.1} parent=5 // pred_check_branch
        %180 = sbr.rel (%p178) target = $region16
      $region15: #{tpu_custom_call.1} parent=5 // pred_region
        // Predicated region
        $region17: #{tpu_custom_call.1} parent=15 // pred_check
          %p181 = pneg %p68
        $region18: #{tpu_custom_call.1} parent=15 // pred_check_branch
          %183 = sbr.rel (%p181) target = $region20
        $region19: #{tpu_custom_call.1} parent=15 // pred_region
          %s184 = sand.u32 %s58, 1
          %s185 = scalar_lea.sflag [#allocation3], %s184
          %s186 = sand.u32 %s58, 1
          %s187 = smul.addr %s186, 8
          %s188 = scalar_lea.vmem [#allocation2], %s187
          %s190 = ssub.s32 128, 128
          %191 = vsyncadd %s185, %s190
          %s192 = sadd.s32 %s28, %s26
          %s193 = sadd.s32 %s192, %s25
          %s194 = smul.addr %s193, 128
          %s195 = scalar_lea.hbm %s0, %s194
          %s197 = sshll.u32 %s188, 4
          %s198 = int_to_ptr.vmem [resolvable:$true] %s197
          %200 = dma.hbm_to_vmem [thread:$0]  %s195, 128, %s198, %s185
        $region20: #{tpu_custom_call.1} parent=15 // pred_fallthru
          _
        // Predicated region
        $region21: #{tpu_custom_call.1} parent=15 // pred_check
          %p201 = pneg %p98
        $region22: #{tpu_custom_call.1} parent=15 // pred_check_branch
          %203 = sbr.rel (%p201) target = $region24
        $region23: #{tpu_custom_call.1} parent=15 // pred_region
          %s204 = sand.u32 %s88, 1
          %s205 = scalar_lea.sflag [#allocation6], %s204
          %s206 = sand.u32 %s88, 1
          %s207 = smul.addr %s206, 128
          %s208 = scalar_lea.vmem [#allocation5], %s207
          %s209 = smul.u32 16, %s28
          %s211 = ssub.s32 2048, 2048
          %212 = vsyncadd %s205, %s211
          %s213 = sadd.s32 %s27, %s209
          %s214 = smul.addr %s25, 16
          %s215 = sadd.s32 %s213, %s214
          %s216 = smul.addr %s215, 128
          %s217 = scalar_lea.hbm %s1, %s216
          %s218 = sshll.u32 %s208, 4
          %s219 = int_to_ptr.vmem [resolvable:$true] %s218
          %224 = dma.hbm_to_vmem [thread:$0]  %s217, 2048, %s219, %s205, 128, 128, 8
        $region24: #{tpu_custom_call.1} parent=15 // pred_fallthru
          _
        // Predicated region
        $region25: #{tpu_custom_call.1} parent=15 // pred_check
          %p225 = pneg %p126
        $region26: #{tpu_custom_call.1} parent=15 // pred_check_branch
          %227 = sbr.rel (%p225) target = $region28
        $region27: #{tpu_custom_call.1} parent=15 // pred_region
          %p228 = scmp.lt.s32.totalorder %s25, 1
          %s229 = scalar_select %p228, %s25, 1
          %p230 = scmp.lt.s32.totalorder %s27, 0
          %s231 = scalar_select %p230, %s27, 0
          %s232 = sadd.s32 %s231, %s229
          %s233 = scalar_lea.vmem %s2, %s232
        $region28: #{tpu_custom_call.1} parent=15 // pred_fallthru
          _
      $region16: #{tpu_custom_call.1} parent=5 // pred_fallthru
        _
      %p234 = scmp.le.s32.totalorder 1, %s18
      %p235 = scmp.lt.s32.totalorder %s18, 3
      %p236 = pnand %p234, %p235
      %p237 = pneg %p236
      // Predicated region
      $region29: #{tpu_custom_call.1} parent=5 // pred_check
        _
      $region30: #{tpu_custom_call.1} parent=5 // pred_check_branch
        %239 = sbr.rel (%p236) target = $region32
      $region31: #{tpu_custom_call.1} parent=5 // pred_region
        %s240 = ssub.s32 %s18, 1
        %s241 = sand.u32 %s61, 1
        %s242 = scalar_lea.sflag [#allocation3], %s241
        %s243 = sand.u32 %s61, 1
        %s244 = smul.addr %s243, 8
        %s245 = scalar_lea.vmem [#allocation2], %s244
        // Predicated region
        $region33: #{tpu_custom_call.1} parent=31 // pred_check
          %p246 = pneg %p74
        $region34: #{tpu_custom_call.1} parent=31 // pred_check_branch
          %248 = sbr.rel (%p246) target = $region36
        $region35: #{tpu_custom_call.1} parent=31 // pred_region
          %249 = dma.done %s242, 128
        $region36: #{tpu_custom_call.1} parent=31 // pred_fallthru
          _
        %s250 = sand.u32 %s91, 1
        %s251 = scalar_lea.sflag [#allocation6], %s250
        %s252 = sand.u32 %s91, 1
        %s253 = smul.addr %s252, 128
        %s254 = scalar_lea.vmem [#allocation5], %s253
        // Predicated region
        $region37: #{tpu_custom_call.1} parent=31 // pred_check
          %p255 = pneg %p104
        $region38: #{tpu_custom_call.1} parent=31 // pred_check_branch
          %257 = sbr.rel (%p255) target = $region40
        $region39: #{tpu_custom_call.1} parent=31 // pred_region
          %258 = dma.done %s251, 2048
        $region40: #{tpu_custom_call.1} parent=31 // pred_fallthru
          _
        %s259 = sand.u32 %s61, 1
        %s260 = scalar_lea.sflag [#allocation3], %s259
        %s261 = sand.u32 %s61, 1
        %s262 = smul.addr %s261, 8
        %s263 = scalar_lea.vmem [#allocation2], %s262
        %p264 = pneg %p74
        %p265 = pneg %p71
        %s266 = sand.u32 %s91, 1
        %s267 = scalar_lea.sflag [#allocation6], %s266
        %s268 = sand.u32 %s91, 1
        %s269 = smul.addr %s268, 128
        %s270 = scalar_lea.vmem [#allocation5], %s269
        %p271 = pneg %p104
        %p272 = pneg %p101
        %p273 = scmp.lt.s32.totalorder %s29, 1
        %s274 = scalar_select %p273, %s29, 1
        %p275 = scmp.lt.s32.totalorder %s31, 0
        %s276 = scalar_select %p275, %s31, 0
        %s277 = sadd.s32 %s276, %s274
        %s278 = scalar_lea.vmem %s2, %s277
        %p279 = pneg %p132
        %p280 = pneg %p129
        %p281 = pneg %p162
        %p282 = pneg %p159
        %s283 = sand.u32 %s149, 1
        %s284 = scalar_lea.sflag [#allocation4], %s283
        %s285 = sand.u32 %s149, 1
        %s286 = smul.addr %s285, 8
        %s287 = scalar_lea.vmem [#allocation7], %s286
        %s288 = smul.u32 16, %s32
        %p289 = scmp.lt.s32.totalorder %s29, 1
        %s290 = scalar_select %p289, %s29, 1
        %p291 = scmp.lt.s32.totalorder %s31, 0
        %s292 = scalar_select %p291, %s31, 0
        %s293 = sadd.s32 %s292, %s290
        %s294 = scalar_lea.vmem %s2, %s293
        %v295 = vld [vmem:[%s245] sm:$0xff]
        %v296 = vld [vmem:[%s254] sm:$0xff]
        %v297 = vld [vmem:[%s254 + $0x8] sm:$0xff]
        %v298 = vld [vmem:[%s254 + $0x10] sm:$0xff]
        %v299 = vld [vmem:[%s254 + $0x18] sm:$0xff]
        %v300 = vld [vmem:[%s254 + $0x20] sm:$0xff]
        %v301 = vld [vmem:[%s254 + $0x28] sm:$0xff]
        %v302 = vld [vmem:[%s254 + $0x30] sm:$0xff]
        %v303 = vld [vmem:[%s254 + $0x38] sm:$0xff]
        %v304 = vld [vmem:[%s254 + $0x40] sm:$0xff]
        %v305 = vld [vmem:[%s254 + $0x48] sm:$0xff]
        %v306 = vld [vmem:[%s254 + $0x50] sm:$0xff]
        %v307 = vld [vmem:[%s254 + $0x58] sm:$0xff]
        %v308 = vld [vmem:[%s254 + $0x60] sm:$0xff]
        %v309 = vld [vmem:[%s254 + $0x68] sm:$0xff]
        %v310 = vld [vmem:[%s254 + $0x70] sm:$0xff]
        %v311 = vld [vmem:[%s254 + $0x78] sm:$0xff]
        %v312 = vld [vmem:[%s294] sm:$0x1]
        %v314 = vlaneseq
        %v315 = vshrl.u32 %v314, 7
        %v316 = vsub.s32 0, %v315
        %v317 = vrot.slane %v312, %v316
        %319 = vmatprep.subr.mxu0 0.0
        %320 = vmatpush1.msra.mxu0 %v296
        %321 = vmatprep.subr.mxu0 0.0
        %322 = vmatpush1.msra.mxu0 %v297
        %323 = vmatprep.subr.mxu0 0.0
        %324 = vmatpush1.msra.mxu0 %v298
        %325 = vmatprep.subr.mxu0 0.0
        %326 = vmatpush1.msra.mxu0 %v299
        %327 = vmatprep.subr.mxu0 0.0
        %328 = vmatpush1.msra.mxu0 %v300
        %329 = vmatprep.subr.mxu0 0.0
        %330 = vmatpush1.msra.mxu0 %v301
        %331 = vmatprep.subr.mxu0 0.0
        %332 = vmatpush1.msra.mxu0 %v302
        %333 = vmatprep.subr.mxu0 0.0
        %334 = vmatpush1.msra.mxu0 %v303
        %335 = vmatprep.subr.mxu0 0.0
        %336 = vmatpush1.msra.mxu0 %v304
        %337 = vmatprep.subr.mxu0 0.0
        %338 = vmatpush1.msra.mxu0 %v305
        %339 = vmatprep.subr.mxu0 0.0
        %340 = vmatpush1.msra.mxu0 %v306
        %341 = vmatprep.subr.mxu0 0.0
        %342 = vmatpush1.msra.mxu0 %v307
        %343 = vmatprep.subr.mxu0 0.0
        %344 = vmatpush1.msra.mxu0 %v308
        %345 = vmatprep.subr.mxu0 0.0
        %346 = vmatpush1.msra.mxu0 %v309
        %347 = vmatprep.subr.mxu0 0.0
        %348 = vmatpush1.msra.mxu0 %v310
        %349 = vmatprep.subr.mxu0 0.0
        %350 = vmatpush1.msra.mxu0 %v311
        %351 = vmatprep.subr.mxu0 0.0
        %352 = vmatpush1.msra.mxu0 0.0
        %353 = vmatprep.subr.mxu0 0.0
        %354 = vmatpush1.msra.mxu0 0.0
        %355 = vmatprep.subr.mxu0 0.0
        %356 = vmatpush1.msra.mxu0 0.0
        %357 = vmatprep.subr.mxu0 0.0
        %358 = vmatpush1.msra.mxu0 0.0
        %359 = vmatprep.subr.mxu0 0.0
        %360 = vmatpush1.msra.mxu0 0.0
        %361 = vmatprep.subr.mxu0 0.0
        %362 = vmatpush1.msra.mxu0 0.0
        %363 = vmatprep.subr.mxu0 0.0
        %364 = vmatpush1.msra.mxu0 0.0
        %365 = vmatprep.subr.mxu0 0.0
        %366 = vmatpush1.msra.mxu0 0.0
        %367 = vmatprep.subr.mxu0 0.0
        %368 = vmatpush1.msra.mxu0 0.0
        %369 = vmatprep.subr.mxu0 0.0
        %370 = vmatpush1.msra.mxu0 0.0
        %371 = vmatprep.subr.mxu0 0.0
        %372 = vmatpush1.msra.mxu0 0.0
        %373 = vmatprep.subr.mxu0 0.0
        %374 = vmatpush1.msra.mxu0 0.0
        %375 = vmatprep.subr.mxu0 0.0
        %376 = vmatpush1.msra.mxu0 0.0
        %377 = vmatprep.subr.mxu0 0.0
        %378 = vmatpush1.msra.mxu0 0.0
        %379 = vmatprep.subr.mxu0 0.0
        %380 = vmatpush1.msra.mxu0 0.0
        %381 = vmatprep.subr.mxu0 0.0
        %382 = vmatpush1.msra.mxu0 0.0
        %383 = vmatprep.mubr.f32.mxu0 0.0
        %384 = vmatmul.mubr.f32.gmra.mrb[0].mxu0 %v295
        %v385 = vpop.f32.mrb[0].mxu0
        %v386 = vadd.f32 %v317, %v385
        %v387 = vpop.f32.mrb[0].mxu0
        %388 = vdwg.mxu0
        %389 = vst [vmem:[%s287] sm:$0xff] %v386
        %s390 = sand.u32 %s149, 1
        %s391 = scalar_lea.sflag [#allocation4], %s390
        %s392 = sand.u32 %s149, 1
        %s393 = smul.addr %s392, 8
        %s394 = scalar_lea.vmem [#allocation7], %s393
        // Predicated region
        $region41: #{tpu_custom_call.1} parent=31 // pred_check
          %p395 = pneg %p159
        $region42: #{tpu_custom_call.1} parent=31 // pred_check_branch
          %397 = sbr.rel (%p395) target = $region44
        $region43: #{tpu_custom_call.1} parent=31 // pred_region
          %s399 = ssub.s32 128, 128
          %400 = vsyncadd %s391, %s399
          %s401 = sadd.s32 %s31, %s30
          %s402 = sadd.s32 %s401, %s29
          %s403 = smul.addr %s402, 128
          %s404 = scalar_lea.hbm %s3, %s403
          %s406 = sshll.u32 %s394, 4
          %s407 = int_to_ptr.vmem [resolvable:$true] %s406
          %409 = dma.vmem_to_hbm [thread:$0]  %s407, 128, %s404, %s391
        $region44: #{tpu_custom_call.1} parent=31 // pred_fallthru
          _
      $region32: #{tpu_custom_call.1} parent=5 // pred_fallthru
        _
      %p410 = scmp.le.s32.totalorder 2, %s18
      // Predicated region
      $region45: #{tpu_custom_call.1} parent=5 // pred_check
        %p411 = pneg %p410
      $region46: #{tpu_custom_call.1} parent=5 // pred_check_branch
        %413 = sbr.rel (%p411) target = $region48
      $region47: #{tpu_custom_call.1} parent=5 // pred_region
        %s414 = ssub.s32 %s18, 2
        // Predicated region
        $region49: #{tpu_custom_call.1} parent=47 // pred_check
          %p415 = pneg %p165
        $region50: #{tpu_custom_call.1} parent=47 // pred_check_branch
          %417 = sbr.rel (%p415) target = $region52
        $region51: #{tpu_custom_call.1} parent=47 // pred_region
          %s418 = sand.u32 %s150, 1
          %s419 = scalar_lea.sflag [#allocation4], %s418
          %s420 = sand.u32 %s150, 1
          %s421 = smul.addr %s420, 8
          %s422 = scalar_lea.vmem [#allocation7], %s421
          %423 = dma.done %s419, 128
        $region52: #{tpu_custom_call.1} parent=47 // pred_fallthru
          _
      $region48: #{tpu_custom_call.1} parent=5 // pred_fallthru
        _
    $region6: #{tpu_custom_call.1} parent=1 // loop_footer
      %s22 = sadd.s32 1, %s18
    $region7: #{tpu_custom_call.1} parent=1 // loop_footer_branch
      %17 = sbr.rel target = $region3
    $region8: #{tpu_custom_call.1} parent=1 // loop_exit
      _
    %424 = vsyncpa [#allocation3], 1
    %s425 = scalar_lea.sflag [#allocation3], 1
    %426 = vsyncpa %s425, 1
    %427 = vsyncpa [#allocation6], 1
    %s428 = scalar_lea.sflag [#allocation6], 1
    %429 = vsyncpa %s428, 1
    %430 = vsyncpa [#allocation4], 1
    %s431 = scalar_lea.sflag [#allocation4], 1
    %432 = vsyncpa %s431, 1

</llo_original>
